<compile_context>
chip_gen: v7x
topology: tpu7x:2x2x1
jax: 0.10.0
libtpu: 0.0.40
codegen_flags: <defaults>
</compile_context>

<pallas_src>
import functools

import jax
import jax.numpy as jnp
from jax.experimental import pallas as pl
from jax.experimental.pallas import tpu as pltpu

EPS = 1e-5
_TILE_CAP = 32768                      # lanes per HW tile in the two-pass path
_FUSE_LIMIT_BYTES = 2 * 1024 * 1024    # x footprint (f32) below which we fuse everything
_VMEM_LIMIT_BYTES = 40 * 1024 * 1024   # v7x-safe scoped VMEM limit


def _pick_tile(hw):
    if hw <= _TILE_CAP:
        return hw, 1
    # Prefer the largest multiple-of-128 tile <= cap that divides HW (no ragged tile).
    t = (_TILE_CAP // 128) * 128
    while t >= 128:
        if hw % t == 0:
            return t, hw // t
        t -= 128
    return _TILE_CAP, pl.cdiv(hw, _TILE_CAP)


# --------------------------------------------------------------------------------------
# Fused path: x resident in VMEM, single pallas_call (stats -> fold -> apply).
# --------------------------------------------------------------------------------------

def _fused_kernel(x_ref, w_ref, g_ref, b_ref, o_ref, *, m, eps):
    # x_ref: (N, Cin, HW)  w_ref: (Cout, Cin)  g_ref/b_ref: (Cout, 1)  o_ref: (N, Cout, HW)
    n_batch, cin, _ = x_ref.shape
    inv_m = 1.0 / m

    # ---- stats pass A: per-channel mean over all N*HW positions ----
    sum_x = jnp.zeros((cin, 1), jnp.float32)
    for n in range(n_batch):
        xn = x_ref[n].astype(jnp.float32)                       # (Cin, HW)
        sum_x = sum_x + jnp.sum(xn, axis=1, keepdims=True)
    mean_x = sum_x * inv_m                                       # (Cin, 1)

    # ---- stats pass B: covariance of x from *centered* data (VMEM-resident, free reread) ----
    cov = jnp.zeros((cin, cin), jnp.float32)
    for n in range(n_batch):
        xc = x_ref[n].astype(jnp.float32) - mean_x               # (Cin, HW)
        cov = cov + jax.lax.dot_general(                         # xc @ xc.T  (MXU)
            xc, xc, (((1,), (1,)), ((), ())),
            preferred_element_type=jnp.float32)
    cov = cov * inv_m                                            # biased covariance

    # ---- fold BN (training-mode batch stats) into the 1x1 conv ----
    w = w_ref[...].astype(jnp.float32)                           # (Cout, Cin)
    mean_y = jnp.dot(w, mean_x, preferred_element_type=jnp.float32)   # (Cout, 1)
    wc = jnp.dot(w, cov, preferred_element_type=jnp.float32)          # (Cout, Cin)
    var_y = jnp.sum(wc * w, axis=1, keepdims=True)                    # (Cout, 1) biased var
    scale = g_ref[...] * jax.lax.rsqrt(var_y + eps)                   # (Cout, 1)
    w_fold = w * scale                                                 # (Cout, Cin)
    b_fold = b_ref[...] - mean_y * scale                               # (Cout, 1)

    # ---- apply: out = relu(W' @ x + b') ----
    for n in range(n_batch):
        y = jnp.dot(w_fold, x_ref[n].astype(jnp.float32),
                    preferred_element_type=jnp.float32)          # (Cout, HW)
        o_ref[n] = jnp.maximum(y + b_fold, 0.0).astype(o_ref.dtype)


# --------------------------------------------------------------------------------------
# Two-pass path (large activations): pass 1 = shift-centered stats, pass 2 = folded apply.
# --------------------------------------------------------------------------------------

def _stats_kernel(shift_ref, x_ref, sumx_ref, gram_ref, *, hw, tile):
    # shift_ref: (Cin, 1) resident   x_ref: (Cin, tile)
    # sumx_ref: (Cin, 1), gram_ref: (Cin, Cin) -- per-batch partials (N axis is parallel)
    t = pl.program_id(1)

    @pl.when(t == 0)
    def _():
        sumx_ref[...] = jnp.zeros_like(sumx_ref)
        gram_ref[...] = jnp.zeros_like(gram_ref)

    xs = x_ref[...].astype(jnp.float32) - shift_ref[...]         # centered by per-channel shift

    def _accum(xv):
        sumx_ref[...] += jnp.sum(xv, axis=1, keepdims=True)
        gram_ref[...] += jax.lax.dot_general(                    # xv @ xv.T  (MXU)
            xv, xv, (((1,), (1,)), ((), ())),
            preferred_element_type=jnp.float32)

    if hw % tile != 0:
        last = pl.num_programs(1) - 1

        @pl.when(t != last)
        def _():
            _accum(xs)

        @pl.when(t == last)
        def _():
            lane = jax.lax.broadcasted_iota(jnp.int32, xs.shape, 1)
            _accum(jnp.where(t * tile + lane < hw, xs, 0.0))
    else:
        _accum(xs)


def _apply_kernel(w_ref, b_ref, x_ref, o_ref):
    # w_ref: (Cout, Cin)  b_ref: (Cout, 1)  x_ref: (Cin, T)  o_ref: (Cout, T)
    y = jnp.dot(w_ref[...], x_ref[...], preferred_element_type=jnp.float32)
    o_ref[...] = jnp.maximum(y + b_ref[...], 0.0).astype(o_ref.dtype)


# --------------------------------------------------------------------------------------
# Wrapper
# --------------------------------------------------------------------------------------

def conv_bn_relu(x_nchw, conv_weight, gamma, beta, eps=EPS, force_two_pass=False):
    """x_nchw: (N,Cin,H,W); conv_weight: (Cout,Cin,1,1) or (Cout,Cin); gamma/beta: (Cout,)."""
    N, Cin, H, W = x_nchw.shape
    Cout = conv_weight.shape[0]
    HW = H * W
    M = N * HW

    w = conv_weight.reshape(Cout, Cin).astype(jnp.float32)
    g2 = gamma.astype(jnp.float32).reshape(Cout, 1)
    b2 = beta.astype(jnp.float32).reshape(Cout, 1)
    x3 = x_nchw.reshape(N, Cin, HW)                               # free view, NCHW-native

    x_bytes = N * Cin * HW * 4

    # ---------------- fused single-call path ----------------
    if (not force_two_pass) and x_bytes <= _FUSE_LIMIT_BYTES:
        cost = pl.CostEstimate(
            flops=int(2 * M * Cin * Cout + 2 * M * Cin * Cin + 3 * M * Cin),
            transcendentals=int(Cout),
            bytes_accessed=int(4 * (M * Cin + M * Cout + Cout * Cin + 2 * Cout)),
        )
        out3 = pl.pallas_call(
            functools.partial(_fused_kernel, m=float(M), eps=eps),
            out_shape=jax.ShapeDtypeStruct((N, Cout, HW), x_nchw.dtype),
            grid=(1,),
            in_specs=[
                pl.BlockSpec((N, Cin, HW), lambda i: (0, 0, 0)),
                pl.BlockSpec((Cout, Cin), lambda i: (0, 0)),
                pl.BlockSpec((Cout, 1), lambda i: (0, 0)),
                pl.BlockSpec((Cout, 1), lambda i: (0, 0)),
            ],
            out_specs=pl.BlockSpec((N, Cout, HW), lambda i: (0, 0, 0)),
            compiler_params=pltpu.CompilerParams(
                dimension_semantics=("arbitrary",),
                vmem_limit_bytes=_VMEM_LIMIT_BYTES,
            ),
            cost_estimate=cost,
        )(x3, w, g2, b2)
        return out3.reshape(N, Cout, H, W)

    # ---------------- two-pass path ----------------
    tile, n_tiles = _pick_tile(HW)

    # Per-channel shift (proxy for the mean) to center the Gram accumulation.
    shift = x3[0, :, 0:1].astype(jnp.float32)                    # (Cin, 1)

    stats_cost = pl.CostEstimate(
        flops=int(2 * M * Cin * Cin + 2 * M * Cin),
        transcendentals=0,
        bytes_accessed=int(4 * (M * Cin + N * Cin * (Cin + 1) + Cin)),
    )
    part_sum, part_gram = pl.pallas_call(
        functools.partial(_stats_kernel, hw=HW, tile=tile),
        out_shape=(jax.ShapeDtypeStruct((N, Cin, 1), jnp.float32),
                   jax.ShapeDtypeStruct((N, Cin, Cin), jnp.float32)),
        grid_spec=pltpu.PrefetchScalarGridSpec(
            num_scalar_prefetch=0,
            grid=(N, n_tiles),
            in_specs=[
                pl.BlockSpec((Cin, 1), lambda n, t: (0, 0)),              # resident shift
                pl.BlockSpec((None, Cin, tile), lambda n, t: (n, 0, t)),  # x tile
            ],
            out_specs=[
                pl.BlockSpec((None, Cin, 1), lambda n, t: (n, 0, 0)),     # per-batch partials
                pl.BlockSpec((None, Cin, Cin), lambda n, t: (n, 0, 0)),
            ],
        ),
        compiler_params=pltpu.CompilerParams(
            dimension_semantics=("parallel", "arbitrary"),
            vmem_limit_bytes=_VMEM_LIMIT_BYTES,
        ),
        cost_estimate=stats_cost,
    )(shift, x3)

    # ---- fold BN (training-mode batch stats, biased variance) into W / b ----
    sum_xs = jnp.sum(part_sum, axis=0)[:, 0]                      # (Cin,)  sum of centered x
    gram_s = jnp.sum(part_gram, axis=0)                           # (Cin, Cin)
    mean_xs = sum_xs / M
    mean_x = shift[:, 0] + mean_xs                                # (Cin,)
    cov_x = gram_s / M - jnp.outer(mean_xs, mean_xs)              # shift-invariant covariance
    mean_y = w @ mean_x                                           # (Cout,)
    var_y = jnp.einsum('oi,ij,oj->o', w, cov_x, w)                # (Cout,) biased var of conv out
    scale = gamma.astype(jnp.float32) * jax.lax.rsqrt(var_y + eps)
    w_fold = w * scale[:, None]                                   # (Cout, Cin)
    b_fold = (beta.astype(jnp.float32) - mean_y * scale).reshape(Cout, 1)

    # ---- pass 2: out = relu(W' @ x + b') ----
    apply_cost = pl.CostEstimate(
        flops=int(2 * M * Cin * Cout),
        transcendentals=0,
        bytes_accessed=int(4 * (M * Cin + M * Cout + Cin * Cout + Cout)),
    )
    out3 = pl.pallas_call(
        _apply_kernel,
        out_shape=jax.ShapeDtypeStruct((N, Cout, HW), x_nchw.dtype),
        grid_spec=pltpu.PrefetchScalarGridSpec(
            num_scalar_prefetch=0,
            grid=(N, n_tiles),
            in_specs=[
                pl.BlockSpec((Cout, Cin), lambda n, t: (0, 0)),           # resident folded weight
                pl.BlockSpec((Cout, 1), lambda n, t: (0, 0)),             # resident folded bias
                pl.BlockSpec((None, Cin, tile), lambda n, t: (n, 0, t)),
            ],
            out_specs=pl.BlockSpec((None, Cout, tile), lambda n, t: (n, 0, t)),
        ),
        compiler_params=pltpu.CompilerParams(
            dimension_semantics=("parallel", "parallel"),
            vmem_limit_bytes=_VMEM_LIMIT_BYTES,
        ),
        cost_estimate=apply_cost,
    )(w_fold, b_fold, x3)

    return out3.reshape(N, Cout, H, W)


if __name__ == "__main__":
    key = jax.random.PRNGKey(0)
    k_x, k_w, k_g, k_b = jax.random.split(key, 4)

    # Channels fixed by the module (16 -> 48); small batch/spatial for the test.
    N, Cin, H, W = 2, 16, 16, 16
    Cout = 48

    x = jax.random.normal(k_x, (N, Cin, H, W), dtype=jnp.float32)
    weight = jax.random.normal(k_w, (Cout, Cin, 1, 1), dtype=jnp.float32) * 0.1
    gamma = 1.0 + 0.1 * jax.random.normal(k_g, (Cout,), dtype=jnp.float32)
    beta = 0.1 * jax.random.normal(k_b, (Cout,), dtype=jnp.float32)

    # Pure-JAX reference (1x1 conv + training-mode BN with biased variance + ReLU).
    w2d = weight.reshape(Cout, Cin)
    y = jnp.einsum('oi,nihw->nohw', w2d, x)
    mean = jnp.mean(y, axis=(0, 2, 3))
    var = jnp.var(y, axis=(0, 2, 3))
    y_hat = (y - mean[None, :, None, None]) * jax.lax.rsqrt(var + EPS)[None, :, None, None]
    ref = jnp.maximum(y_hat * gamma[None, :, None, None] + beta[None, :, None, None], 0.0)

    # Fused (VMEM-resident) path — the one the module's real shape (1,16,56,56) takes.
    out_fused = jax.block_until_ready(conv_bn_relu(x, weight, gamma, beta))
    assert out_fused.shape == (N, Cout, H, W), out_fused.shape
    err_f = float(jnp.max(jnp.abs(out_fused - ref)))
    assert err_f < 1e-3, f"fused path max abs error {err_f}"

    # Tiled two-pass path (large-activation fallback), forced here for coverage.
    out_tiled = jax.block_until_ready(
        conv_bn_relu(x, weight, gamma, beta, force_two_pass=True))
    err_t = float(jnp.max(jnp.abs(out_tiled - ref)))
    assert err_t < 1e-3, f"two-pass path max abs error {err_t}"

    print("KERNEL_OK")
</pallas_src>

<mosaic_0001>
module attributes {stable_mosaic.version = 11 : i64} {
  func.func @_fused_kernel(%arg0: i32, %arg1: memref<2x16x256xf32, #tpu.memory_space<vmem>>, %arg2: memref<48x16xf32, #tpu.memory_space<vmem>>, %arg3: memref<48x1xf32, #tpu.memory_space<vmem>>, %arg4: memref<48x1xf32, #tpu.memory_space<vmem>>, %arg5: memref<2x48x256xf32, #tpu.memory_space<vmem>>) attributes {dimension_semantics = [#tpu.dimension_semantics<arbitrary>], iteration_bounds = array<i64: 1>, scalar_prefetch = 0 : i64, scratch_operands = 0 : i64, tpu.core_type = #tpu.core_type<tc>, window_params = [{pipeline_mode = #tpu.pipeline_mode<synchronous>, transform_indices = @transform_0, window_bounds = array<i64: 2, 16, 256>}, {pipeline_mode = #tpu.pipeline_mode<synchronous>, transform_indices = @transform_1, window_bounds = array<i64: 48, 16>}, {pipeline_mode = #tpu.pipeline_mode<synchronous>, transform_indices = @transform_2, window_bounds = array<i64: 48, 1>}, {pipeline_mode = #tpu.pipeline_mode<synchronous>, transform_indices = @transform_3, window_bounds = array<i64: 48, 1>}, {pipeline_mode = #tpu.pipeline_mode<synchronous>, transform_indices = @transform_4, window_bounds = array<i64: 2, 48, 256>}]} {
    %cst = arith.constant 0.000000e+00 : f32
    %0 = vector.broadcast %cst : f32 to vector<16x1xf32>
    %c0 = arith.constant 0 : index
    %c0_0 = arith.constant 0 : index
    %c0_1 = arith.constant 0 : index
    %1 = vector.load %arg1[%c0, %c0_0, %c0_1] : memref<2x16x256xf32, #tpu.memory_space<vmem>>, vector<1x16x256xf32>
    %2 = vector.shape_cast %1 : vector<1x16x256xf32> to vector<16x256xf32>
    %cst_2 = arith.constant dense<0.000000e+00> : vector<16xf32>
    %3 = vector.multi_reduction <add>, %2, %cst_2 [1] : vector<16x256xf32> to vector<16xf32>
    %4 = vector.shape_cast %3 : vector<16xf32> to vector<16x1xf32>
    %5 = arith.addf %0, %4 : vector<16x1xf32>
    %c1 = arith.constant 1 : index
    %c0_3 = arith.constant 0 : index
    %c0_4 = arith.constant 0 : index
    %6 = vector.load %arg1[%c1, %c0_3, %c0_4] : memref<2x16x256xf32, #tpu.memory_space<vmem>>, vector<1x16x256xf32>
    %7 = vector.shape_cast %6 : vector<1x16x256xf32> to vector<16x256xf32>
    %cst_5 = arith.constant dense<0.000000e+00> : vector<16xf32>
    %8 = vector.multi_reduction <add>, %7, %cst_5 [1] : vector<16x256xf32> to vector<16xf32>
    %9 = vector.shape_cast %8 : vector<16xf32> to vector<16x1xf32>
    %10 = arith.addf %5, %9 : vector<16x1xf32>
    %cst_6 = arith.constant 0.001953125 : f32
    %11 = vector.broadcast %cst_6 : f32 to vector<16x1xf32>
    %12 = arith.mulf %10, %11 : vector<16x1xf32>
    %cst_7 = arith.constant 0.000000e+00 : f32
    %13 = vector.broadcast %cst_7 : f32 to vector<16x16xf32>
    %c0_8 = arith.constant 0 : index
    %c0_9 = arith.constant 0 : index
    %c0_10 = arith.constant 0 : index
    %14 = vector.load %arg1[%c0_8, %c0_9, %c0_10] : memref<2x16x256xf32, #tpu.memory_space<vmem>>, vector<1x16x256xf32>
    %15 = vector.shape_cast %14 : vector<1x16x256xf32> to vector<16x256xf32>
    %16 = vector.broadcast %12 : vector<16x1xf32> to vector<16x256xf32>
    %17 = arith.subf %15, %16 : vector<16x256xf32>
    %cst_11 = arith.constant dense<0.000000e+00> : vector<16x16xf32>
    %18 = tpu.matmul %17, %17, %cst_11 {dimension_numbers = #tpu.dot_dimension_numbers<[1], [1], [0], [0], [0, 0, 1, 0], [], []>} : vector<16x256xf32>, vector<16x256xf32>, vector<16x16xf32> -> vector<16x16xf32>
    %19 = arith.addf %13, %18 : vector<16x16xf32>
    %c1_12 = arith.constant 1 : index
    %c0_13 = arith.constant 0 : index
    %c0_14 = arith.constant 0 : index
    %20 = vector.load %arg1[%c1_12, %c0_13, %c0_14] : memref<2x16x256xf32, #tpu.memory_space<vmem>>, vector<1x16x256xf32>
    %21 = vector.shape_cast %20 : vector<1x16x256xf32> to vector<16x256xf32>
    %22 = vector.broadcast %12 : vector<16x1xf32> to vector<16x256xf32>
    %23 = arith.subf %21, %22 : vector<16x256xf32>
    %cst_15 = arith.constant dense<0.000000e+00> : vector<16x16xf32>
    %24 = tpu.matmul %23, %23, %cst_15 {dimension_numbers = #tpu.dot_dimension_numbers<[1], [1], [0], [0], [0, 0, 1, 0], [], []>} : vector<16x256xf32>, vector<16x256xf32>, vector<16x16xf32> -> vector<16x16xf32>
    %25 = arith.addf %19, %24 : vector<16x16xf32>
    %cst_16 = arith.constant 0.001953125 : f32
    %26 = vector.broadcast %cst_16 : f32 to vector<16x16xf32>
    %27 = arith.mulf %25, %26 : vector<16x16xf32>
    %c0_17 = arith.constant 0 : index
    %c0_18 = arith.constant 0 : index
    %28 = vector.load %arg2[%c0_17, %c0_18] : memref<48x16xf32, #tpu.memory_space<vmem>>, vector<48x16xf32>
    %cst_19 = arith.constant dense<0.000000e+00> : vector<48x1xf32>
    %29 = tpu.matmul %28, %12, %cst_19 {dimension_numbers = #tpu.dot_dimension_numbers<[1], [0], [0], [1], [0, 0, 1, 1], [], []>} : vector<48x16xf32>, vector<16x1xf32>, vector<48x1xf32> -> vector<48x1xf32>
    %cst_20 = arith.constant dense<0.000000e+00> : vector<48x16xf32>
    %30 = tpu.matmul %28, %27, %cst_20 {dimension_numbers = #tpu.dot_dimension_numbers<[1], [0], [0], [1], [0, 0, 1, 1], [], []>} : vector<48x16xf32>, vector<16x16xf32>, vector<48x16xf32> -> vector<48x16xf32>
    %31 = arith.mulf %30, %28 : vector<48x16xf32>
    %cst_21 = arith.constant dense<0.000000e+00> : vector<48xf32>
    %32 = vector.multi_reduction <add>, %31, %cst_21 [1] : vector<48x16xf32> to vector<48xf32>
    %33 = vector.shape_cast %32 : vector<48xf32> to vector<48x1xf32>
    %c0_22 = arith.constant 0 : index
    %c0_23 = arith.constant 0 : index
    %34 = vector.load %arg3[%c0_22, %c0_23] : memref<48x1xf32, #tpu.memory_space<vmem>>, vector<48x1xf32>
    %cst_24 = arith.constant 9.99999974E-6 : f32
    %35 = vector.broadcast %cst_24 : f32 to vector<48x1xf32>
    %36 = arith.addf %33, %35 : vector<48x1xf32>
    %37 = math.rsqrt %36 : vector<48x1xf32>
    %38 = arith.mulf %34, %37 : vector<48x1xf32>
    %39 = vector.broadcast %38 : vector<48x1xf32> to vector<48x16xf32>
    %40 = arith.mulf %28, %39 : vector<48x16xf32>
    %c0_25 = arith.constant 0 : index
    %c0_26 = arith.constant 0 : index
    %41 = vector.load %arg4[%c0_25, %c0_26] : memref<48x1xf32, #tpu.memory_space<vmem>>, vector<48x1xf32>
    %42 = arith.mulf %29, %38 : vector<48x1xf32>
    %43 = arith.subf %41, %42 : vector<48x1xf32>
    %c0_27 = arith.constant 0 : index
    %c0_28 = arith.constant 0 : index
    %c0_29 = arith.constant 0 : index
    %44 = vector.load %arg1[%c0_27, %c0_28, %c0_29] : memref<2x16x256xf32, #tpu.memory_space<vmem>>, vector<1x16x256xf32>
    %45 = vector.shape_cast %44 : vector<1x16x256xf32> to vector<16x256xf32>
    %cst_30 = arith.constant dense<0.000000e+00> : vector<48x256xf32>
    %46 = tpu.matmul %40, %45, %cst_30 {dimension_numbers = #tpu.dot_dimension_numbers<[1], [0], [0], [1], [0, 0, 1, 1], [], []>} : vector<48x16xf32>, vector<16x256xf32>, vector<48x256xf32> -> vector<48x256xf32>
    %47 = vector.broadcast %43 : vector<48x1xf32> to vector<48x256xf32>
    %48 = arith.addf %46, %47 : vector<48x256xf32>
    %cst_31 = arith.constant 0.000000e+00 : f32
    %49 = vector.broadcast %cst_31 : f32 to vector<48x256xf32>
    %50 = arith.maximumf %48, %49 : vector<48x256xf32>
    %c0_32 = arith.constant 0 : index
    %c0_33 = arith.constant 0 : index
    %c0_34 = arith.constant 0 : index
    %51 = vector.load %arg5[%c0_32, %c0_33, %c0_34] : memref<2x48x256xf32, #tpu.memory_space<vmem>>, vector<1x48x256xf32>
    %52 = vector.shape_cast %51 : vector<1x48x256xf32> to vector<48x256xf32>
    %53 = vector.shape_cast %50 : vector<48x256xf32> to vector<1x48x256xf32>
    tpu.vector_store %arg5[%c0_32, %c0_33, %c0_34], %53 {strides = array<i32>} : memref<2x48x256xf32, #tpu.memory_space<vmem>>, vector<1x48x256xf32>,
    %c1_35 = arith.constant 1 : index
    %c0_36 = arith.constant 0 : index
    %c0_37 = arith.constant 0 : index
    %54 = vector.load %arg1[%c1_35, %c0_36, %c0_37] : memref<2x16x256xf32, #tpu.memory_space<vmem>>, vector<1x16x256xf32>
    %55 = vector.shape_cast %54 : vector<1x16x256xf32> to vector<16x256xf32>
    %cst_38 = arith.constant dense<0.000000e+00> : vector<48x256xf32>
    %56 = tpu.matmul %40, %55, %cst_38 {dimension_numbers = #tpu.dot_dimension_numbers<[1], [0], [0], [1], [0, 0, 1, 1], [], []>} : vector<48x16xf32>, vector<16x256xf32>, vector<48x256xf32> -> vector<48x256xf32>
    %57 = vector.broadcast %43 : vector<48x1xf32> to vector<48x256xf32>
    %58 = arith.addf %56, %57 : vector<48x256xf32>
    %cst_39 = arith.constant 0.000000e+00 : f32
    %59 = vector.broadcast %cst_39 : f32 to vector<48x256xf32>
    %60 = arith.maximumf %58, %59 : vector<48x256xf32>
    %c1_40 = arith.constant 1 : index
    %c0_41 = arith.constant 0 : index
    %c0_42 = arith.constant 0 : index
    %61 = vector.load %arg5[%c1_40, %c0_41, %c0_42] : memref<2x48x256xf32, #tpu.memory_space<vmem>>, vector<1x48x256xf32>
    %62 = vector.shape_cast %61 : vector<1x48x256xf32> to vector<48x256xf32>
    %63 = vector.shape_cast %60 : vector<48x256xf32> to vector<1x48x256xf32>
    tpu.vector_store %arg5[%c1_40, %c0_41, %c0_42], %63 {strides = array<i32>} : memref<2x48x256xf32, #tpu.memory_space<vmem>>, vector<1x48x256xf32>,
    return
  }
  func.func @transform_0(%arg0: i32) -> (i32, i32, i32) {
    %c0_i32 = arith.constant 0 : i32
    %c0_i32_0 = arith.constant 0 : i32
    %c0_i32_1 = arith.constant 0 : i32
    %c0_i32_2 = arith.constant 0 : i32
    return %c0_i32, %c0_i32_0, %c0_i32_1 : i32, i32, i32
  }
  func.func @transform_1(%arg0: i32) -> (i32, i32) {
    %c0_i32 = arith.constant 0 : i32
    %c0_i32_0 = arith.constant 0 : i32
    %c0_i32_1 = arith.constant 0 : i32
    return %c0_i32, %c0_i32_0 : i32, i32
  }
  func.func @transform_2(%arg0: i32) -> (i32, i32) {
    %c0_i32 = arith.constant 0 : i32
    %c0_i32_0 = arith.constant 0 : i32
    %c0_i32_1 = arith.constant 0 : i32
    return %c0_i32, %c0_i32_0 : i32, i32
  }
  func.func @transform_3(%arg0: i32) -> (i32, i32) {
    %c0_i32 = arith.constant 0 : i32
    %c0_i32_0 = arith.constant 0 : i32
    %c0_i32_1 = arith.constant 0 : i32
    return %c0_i32, %c0_i32_0 : i32, i32
  }
  func.func @transform_4(%arg0: i32) -> (i32, i32, i32) {
    %c0_i32 = arith.constant 0 : i32
    %c0_i32_0 = arith.constant 0 : i32
    %c0_i32_1 = arith.constant 0 : i32
    %c0_i32_2 = arith.constant 0 : i32
    return %c0_i32, %c0_i32_0, %c0_i32_1 : i32, i32, i32
  }
}

</mosaic_0001>

<llo_original>
// kernel: tpu_custom_call.1
$region0: #{tpu_custom_call.1}
  #allocation0 [shape = 'u32[]', space=smem, size = 0x4, offset = 0x4, fixed_abs, tag = 'smem constant byte address 0x4 - core index']
  #allocation1 [shape = 'u32[144,128]{1,0:T(1,128)}', space=vmem, size = 0x12000, scoped, tag = 'internal scratch']
  %s0 = inlined_call_operand.vmem [shape: f32[2,16,256], index: 0, kind: input, shape index: {}]
  %s1 = inlined_call_operand.vmem [shape: f32[48,16], index: 1, kind: input, shape index: {}]
  %s2 = inlined_call_operand.vmem [shape: f32[48,1], index: 2, kind: input, shape index: {}]
  %s3 = inlined_call_operand.vmem [shape: f32[48,1], index: 3, kind: input, shape index: {}]
  %s4 = inlined_call_operand.hbm [shape: f32[2,48,256], index: 4, kind: output, shape index: {}]
  %s5 = sld [smem:[#allocation0]]
  $region26: #{tpu_custom_call.1} parent=0
    _
  %s7 = ssub.s32 1, %s5
  %s8 = scalar_select 0, %s7, %s5
  $region1: #{tpu_custom_call.1} parent=0
    #allocation2 [shape = 'u8[98304]{0}', space=vmem, size = 0x18000, scoped, tag = 'output window, operand 0, single buffered']
    #allocation3 [shape = 's32[1]{0}', space=sflag, size = 0x4, scoped, tag = 'scoped memory for tpu_custom_call.1']
    %9 = vsyncpa [#allocation3], 0
    // Predicated region
    $region2: #{tpu_custom_call.1} parent=1 // pred_check
      _
    $region3: #{tpu_custom_call.1} parent=1 // pred_check_branch
      %11 = sbr.rel (0) target = $region5
    $region4: #{tpu_custom_call.1} parent=1 // pred_region
      _
    $region5: #{tpu_custom_call.1} parent=1 // pred_fallthru
      _
    // Predicated region
    $region6: #{tpu_custom_call.1} parent=1 // pred_check
      _
    $region7: #{tpu_custom_call.1} parent=1 // pred_check_branch
      %13 = sbr.rel (0) target = $region9
    $region8: #{tpu_custom_call.1} parent=1 // pred_region
      _
    $region9: #{tpu_custom_call.1} parent=1 // pred_fallthru
      _
    // Predicated region
    $region10: #{tpu_custom_call.1} parent=1 // pred_check
      _
    $region11: #{tpu_custom_call.1} parent=1 // pred_check_branch
      %15 = sbr.rel (0) target = $region13
    $region12: #{tpu_custom_call.1} parent=1 // pred_region
      _
    $region13: #{tpu_custom_call.1} parent=1 // pred_fallthru
      _
    // Predicated region
    $region14: #{tpu_custom_call.1} parent=1 // pred_check
      _
    $region15: #{tpu_custom_call.1} parent=1 // pred_check_branch
      %17 = sbr.rel (0) target = $region17
    $region16: #{tpu_custom_call.1} parent=1 // pred_region
      _
    $region17: #{tpu_custom_call.1} parent=1 // pred_fallthru
      _
    %v18 = vld [vmem:[%s0] sm:$0xff]
    %v19 = vld [vmem:[%s0 + $0x8] sm:$0xff]
    %v20 = vld [vmem:[%s0 + $0x10] sm:$0xff]
    %v21 = vld [vmem:[%s0 + $0x18] sm:$0xff]
    %v22 = vadd.f32 %v18, %v19
    %23 = vadd.xlane.f32.xlu0 %v22
    %v24 = vpop.xlane.xlu0 %23
    %v25 = vadd.f32 %v20, %v21
    %26 = vadd.xlane.f32.xlu0 %v25
    %v27 = vpop.xlane.xlu0 %26
    %v28 = vadd.f32 %v24, 0.0
    %v29 = vadd.f32 %v27, 0.0
    %s30 = scalar_lea.vmem %s0, 32
    %v31 = vld [vmem:[%s30] sm:$0xff]
    %v32 = vld [vmem:[%s30 + $0x8] sm:$0xff]
    %v33 = vld [vmem:[%s30 + $0x10] sm:$0xff]
    %v34 = vld [vmem:[%s30 + $0x18] sm:$0xff]
    %v35 = vadd.f32 %v31, %v32
    %36 = vadd.xlane.f32.xlu0 %v35
    %v37 = vpop.xlane.xlu0 %36
    %v38 = vadd.f32 %v33, %v34
    %39 = vadd.xlane.f32.xlu0 %v38
    %v40 = vpop.xlane.xlu0 %39
    %v41 = vadd.f32 %v28, %v37
    %v42 = vadd.f32 %v29, %v40
    %v43 = vmul.f32 %v41, 0.001953125
    %v44 = vmul.f32 %v42, 0.001953125
    %v45 = vsub.f32 %v18, %v43
    %v46 = vsub.f32 %v19, %v43
    %v47 = vsub.f32 %v20, %v44
    %v48 = vsub.f32 %v21, %v44
    %v49 = vsub.f32 %v31, %v43
    %v50 = vsub.f32 %v32, %v43
    %v51 = vsub.f32 %v33, %v44
    %v52 = vsub.f32 %v34, %v44
    %53 = vmatprep.subr.mxu0 %v50
    %54 = vmatpush1.xpose.msra.mxu0 %v49
    %55 = vmatprep.subr.mxu0 %v52
    %56 = vmatpush1.xpose.msra.mxu0 %v51
    %57 = vmatprep.subr.mxu0 0.0
    %58 = vmatpush1.xpose.msra.mxu0 0.0
    %59 = vmatprep.subr.mxu0 0.0
    %60 = vmatpush1.xpose.msra.mxu0 0.0
    %61 = vmatprep.subr.mxu0 0.0
    %62 = vmatpush1.xpose.msra.mxu0 0.0
    %63 = vmatprep.subr.mxu0 0.0
    %64 = vmatpush1.xpose.msra.mxu0 0.0
    %65 = vmatprep.subr.mxu0 0.0
    %66 = vmatpush1.xpose.msra.mxu0 0.0
    %67 = vmatprep.subr.mxu0 0.0
    %68 = vmatpush1.xpose.msra.mxu0 0.0
    %69 = vmatprep.subr.mxu0 0.0
    %70 = vmatpush1.xpose.msra.mxu0 0.0
    %71 = vmatprep.subr.mxu0 0.0
    %72 = vmatpush1.xpose.msra.mxu0 0.0
    %73 = vmatprep.subr.mxu0 0.0
    %74 = vmatpush1.xpose.msra.mxu0 0.0
    %75 = vmatprep.subr.mxu0 0.0
    %76 = vmatpush1.xpose.msra.mxu0 0.0
    %77 = vmatprep.subr.mxu0 0.0
    %78 = vmatpush1.xpose.msra.mxu0 0.0
    %79 = vmatprep.subr.mxu0 0.0
    %80 = vmatpush1.xpose.msra.mxu0 0.0
    %81 = vmatprep.subr.mxu0 0.0
    %82 = vmatpush1.xpose.msra.mxu0 0.0
    %83 = vmatprep.subr.mxu0 0.0
    %84 = vmatpush1.xpose.msra.mxu0 0.0
    %85 = vmatprep.subr.mxu0 0.0
    %86 = vmatpush1.xpose.msra.mxu0 0.0
    %87 = vmatprep.subr.mxu0 0.0
    %88 = vmatpush1.xpose.msra.mxu0 0.0
    %89 = vmatprep.subr.mxu0 0.0
    %90 = vmatpush1.xpose.msra.mxu0 0.0
    %91 = vmatprep.subr.mxu0 0.0
    %92 = vmatpush1.xpose.msra.mxu0 0.0
    %93 = vmatprep.subr.mxu0 0.0
    %94 = vmatpush1.xpose.msra.mxu0 0.0
    %95 = vmatprep.subr.mxu0 0.0
    %96 = vmatpush1.xpose.msra.mxu0 0.0
    %97 = vmatprep.subr.mxu0 0.0
    %98 = vmatpush1.xpose.msra.mxu0 0.0
    %99 = vmatprep.subr.mxu0 0.0
    %100 = vmatpush1.xpose.msra.mxu0 0.0
    %101 = vmatprep.subr.mxu0 0.0
    %102 = vmatpush1.xpose.msra.mxu0 0.0
    %103 = vmatprep.subr.mxu0 0.0
    %104 = vmatpush1.xpose.msra.mxu0 0.0
    %105 = vmatprep.subr.mxu0 0.0
    %106 = vmatpush1.xpose.msra.mxu0 0.0
    %107 = vmatprep.subr.mxu0 0.0
    %108 = vmatpush1.xpose.msra.mxu0 0.0
    %109 = vmatprep.subr.mxu0 0.0
    %110 = vmatpush1.xpose.msra.mxu0 0.0
    %111 = vmatprep.subr.mxu0 0.0
    %112 = vmatpush1.xpose.msra.mxu0 0.0
    %113 = vmatprep.subr.mxu0 0.0
    %114 = vmatpush1.xpose.msra.mxu0 0.0
    %115 = vmatprep.subr.mxu0 0.0
    %116 = vmatpush1.xpose.msra.mxu0 0.0
    %117 = vmatprep.mubr.f32.mxu0 %v50
    %118 = vmatmul.mubr.f32.gmra.mrb[0].mxu0 %v49
    %v119 = vpop.f32.mrb[0].mxu0
    %v120 = vadd.f32 0.0, %v119
    %v121 = vpop.f32.mrb[0].mxu0
    %122 = vmatprep.mubr.f32.mxu0 %v52
    %123 = vmatmul.mubr.f32.gmra.mrb[0].mxu0 %v51
    %v124 = vpop.f32.mrb[0].mxu0
    %v125 = vadd.f32 0.0, %v124
    %v126 = vpop.f32.mrb[0].mxu0
    %127 = vdwg.mxu0
    %128 = vmatprep.subr.mxu0 %v46
    %129 = vmatpush1.xpose.msra.mxu0 %v45
    %130 = vmatprep.subr.mxu0 %v48
    %131 = vmatpush1.xpose.msra.mxu0 %v47
    %132 = vmatprep.subr.mxu0 0.0
    %133 = vmatpush1.xpose.msra.mxu0 0.0
    %134 = vmatprep.subr.mxu0 0.0
    %135 = vmatpush1.xpose.msra.mxu0 0.0
    %136 = vmatprep.subr.mxu0 0.0
    %137 = vmatpush1.xpose.msra.mxu0 0.0
    %138 = vmatprep.subr.mxu0 0.0
    %139 = vmatpush1.xpose.msra.mxu0 0.0
    %140 = vmatprep.subr.mxu0 0.0
    %141 = vmatpush1.xpose.msra.mxu0 0.0
    %142 = vmatprep.subr.mxu0 0.0
    %143 = vmatpush1.xpose.msra.mxu0 0.0
    %144 = vmatprep.subr.mxu0 0.0
    %145 = vmatpush1.xpose.msra.mxu0 0.0
    %146 = vmatprep.subr.mxu0 0.0
    %147 = vmatpush1.xpose.msra.mxu0 0.0
    %148 = vmatprep.subr.mxu0 0.0
    %149 = vmatpush1.xpose.msra.mxu0 0.0
    %150 = vmatprep.subr.mxu0 0.0
    %151 = vmatpush1.xpose.msra.mxu0 0.0
    %152 = vmatprep.subr.mxu0 0.0
    %153 = vmatpush1.xpose.msra.mxu0 0.0
    %154 = vmatprep.subr.mxu0 0.0
    %155 = vmatpush1.xpose.msra.mxu0 0.0
    %156 = vmatprep.subr.mxu0 0.0
    %157 = vmatpush1.xpose.msra.mxu0 0.0
    %158 = vmatprep.subr.mxu0 0.0
    %159 = vmatpush1.xpose.msra.mxu0 0.0
    %160 = vmatprep.subr.mxu0 0.0
    %161 = vmatpush1.xpose.msra.mxu0 0.0
    %162 = vmatprep.subr.mxu0 0.0
    %163 = vmatpush1.xpose.msra.mxu0 0.0
    %164 = vmatprep.subr.mxu0 0.0
    %165 = vmatpush1.xpose.msra.mxu0 0.0
    %166 = vmatprep.subr.mxu0 0.0
    %167 = vmatpush1.xpose.msra.mxu0 0.0
    %168 = vmatprep.subr.mxu0 0.0
    %169 = vmatpush1.xpose.msra.mxu0 0.0
    %170 = vmatprep.subr.mxu0 0.0
    %171 = vmatpush1.xpose.msra.mxu0 0.0
    %172 = vmatprep.subr.mxu0 0.0
    %173 = vmatpush1.xpose.msra.mxu0 0.0
    %174 = vmatprep.subr.mxu0 0.0
    %175 = vmatpush1.xpose.msra.mxu0 0.0
    %176 = vmatprep.subr.mxu0 0.0
    %177 = vmatpush1.xpose.msra.mxu0 0.0
    %178 = vmatprep.subr.mxu0 0.0
    %179 = vmatpush1.xpose.msra.mxu0 0.0
    %180 = vmatprep.subr.mxu0 0.0
    %181 = vmatpush1.xpose.msra.mxu0 0.0
    %182 = vmatprep.subr.mxu0 0.0
    %183 = vmatpush1.xpose.msra.mxu0 0.0
    %184 = vmatprep.subr.mxu0 0.0
    %185 = vmatpush1.xpose.msra.mxu0 0.0
    %186 = vmatprep.subr.mxu0 0.0
    %187 = vmatpush1.xpose.msra.mxu0 0.0
    %188 = vmatprep.subr.mxu0 0.0
    %189 = vmatpush1.xpose.msra.mxu0 0.0
    %190 = vmatprep.subr.mxu0 0.0
    %191 = vmatpush1.xpose.msra.mxu0 0.0
    %192 = vmatprep.mubr.f32.mxu0 %v46
    %193 = vmatmul.mubr.f32.gmra.mrb[0].mxu0 %v45
    %v194 = vpop.f32.mrb[0].mxu0
    %v195 = vadd.f32 %v120, %v194
    %v196 = vpop.f32.mrb[0].mxu0
    %197 = vmatprep.mubr.f32.mxu0 %v48
    %198 = vmatmul.mubr.f32.gmra.mrb[0].mxu0 %v47
    %v199 = vpop.f32.mrb[0].mxu0
    %v200 = vadd.f32 %v125, %v199
    %v201 = vpop.f32.mrb[0].mxu0
    %202 = vdwg.mxu0
    %v203 = vmul.f32 %v195, 0.001953125
    %v204 = vmul.f32 %v200, 0.001953125
    %v205 = vld [vmem:[%s1] sm:$0xff]
    %v206 = vld [vmem:[%s1 + $0x8] sm:$0xff]
    %v207 = vld [vmem:[%s1 + $0x10] sm:$0xff]
    %v208 = vld [vmem:[%s1 + $0x18] sm:$0xff]
    %v209 = vld [vmem:[%s1 + $0x20] sm:$0xff]
    %v210 = vld [vmem:[%s1 + $0x28] sm:$0xff]
    %vm211 = vcmask 130048
    %v213 = vsel %vm211, %v205, 0
    %v216 = vsel %vm211, %v206, 0
    %v219 = vsel %vm211, %v207, 0
    %v222 = vsel %vm211, %v208, 0
    %v225 = vsel %vm211, %v209, 0
    %v228 = vsel %vm211, %v210, 0
    %230 = vmatprep.subr.mxu0 0.0
    %231 = vmatpush1.msra.mxu0 %v43
    %232 = vmatprep.subr.mxu0 0.0
    %233 = vmatpush1.msra.mxu0 %v44
    %234 = vmatprep.subr.mxu0 0.0
    %235 = vmatpush1.msra.mxu0 0.0
    %236 = vmatprep.subr.mxu0 0.0
    %237 = vmatpush1.msra.mxu0 0.0
    %238 = vmatprep.subr.mxu0 0.0
    %239 = vmatpush1.msra.mxu0 0.0
    %240 = vmatprep.subr.mxu0 0.0
    %241 = vmatpush1.msra.mxu0 0.0
    %242 = vmatprep.subr.mxu0 0.0
    %243 = vmatpush1.msra.mxu0 0.0
    %244 = vmatprep.subr.mxu0 0.0
    %245 = vmatpush1.msra.mxu0 0.0
    %246 = vmatprep.subr.mxu0 0.0
    %247 = vmatpush1.msra.mxu0 0.0
    %248 = vmatprep.subr.mxu0 0.0
    %249 = vmatpush1.msra.mxu0 0.0
    %250 = vmatprep.subr.mxu0 0.0
    %251 = vmatpush1.msra.mxu0 0.0
    %252 = vmatprep.subr.mxu0 0.0
    %253 = vmatpush1.msra.mxu0 0.0
    %254 = vmatprep.subr.mxu0 0.0
    %255 = vmatpush1.msra.mxu0 0.0
    %256 = vmatprep.subr.mxu0 0.0
    %257 = vmatpush1.msra.mxu0 0.0
    %258 = vmatprep.subr.mxu0 0.0
    %259 = vmatpush1.msra.mxu0 0.0
    %260 = vmatprep.subr.mxu0 0.0
    %261 = vmatpush1.msra.mxu0 0.0
    %262 = vmatprep.subr.mxu0 0.0
    %263 = vmatpush1.msra.mxu0 0.0
    %264 = vmatprep.subr.mxu0 0.0
    %265 = vmatpush1.msra.mxu0 0.0
    %266 = vmatprep.subr.mxu0 0.0
    %267 = vmatpush1.msra.mxu0 0.0
    %268 = vmatprep.subr.mxu0 0.0
    %269 = vmatpush1.msra.mxu0 0.0
    %270 = vmatprep.subr.mxu0 0.0
    %271 = vmatpush1.msra.mxu0 0.0
    %272 = vmatprep.subr.mxu0 0.0
    %273 = vmatpush1.msra.mxu0 0.0
    %274 = vmatprep.subr.mxu0 0.0
    %275 = vmatpush1.msra.mxu0 0.0
    %276 = vmatprep.subr.mxu0 0.0
    %277 = vmatpush1.msra.mxu0 0.0
    %278 = vmatprep.subr.mxu0 0.0
    %279 = vmatpush1.msra.mxu0 0.0
    %280 = vmatprep.subr.mxu0 0.0
    %281 = vmatpush1.msra.mxu0 0.0
    %282 = vmatprep.subr.mxu0 0.0
    %283 = vmatpush1.msra.mxu0 0.0
    %284 = vmatprep.subr.mxu0 0.0
    %285 = vmatpush1.msra.mxu0 0.0
    %286 = vmatprep.subr.mxu0 0.0
    %287 = vmatpush1.msra.mxu0 0.0
    %288 = vmatprep.subr.mxu0 0.0
    %289 = vmatpush1.msra.mxu0 0.0
    %290 = vmatprep.subr.mxu0 0.0
    %291 = vmatpush1.msra.mxu0 0.0
    %292 = vmatprep.subr.mxu0 0.0
    %293 = vmatpush1.msra.mxu0 0.0
    %294 = vmatprep.mubr.f32.mxu0 0.0
    %295 = vmatmul.mubr.f32.gmra.mrb[0].mxu0 %v213
    %v296 = vpop.f32.mrb[0].mxu0
    %v297 = vadd.f32 0.0, %v296
    %v298 = vpop.f32.mrb[0].mxu0
    %299 = vmatprep.mubr.f32.mxu0 0.0
    %300 = vmatmul.mubr.f32.gmra.mrb[0].mxu0 %v216
    %v301 = vpop.f32.mrb[0].mxu0
    %v302 = vadd.f32 0.0, %v301
    %v303 = vpop.f32.mrb[0].mxu0
    %304 = vmatprep.mubr.f32.mxu0 0.0
    %305 = vmatmul.mubr.f32.gmra.mrb[0].mxu0 %v219
    %v306 = vpop.f32.mrb[0].mxu0
    %v307 = vadd.f32 0.0, %v306
    %v308 = vpop.f32.mrb[0].mxu0
    %309 = vmatprep.mubr.f32.mxu0 0.0
    %310 = vmatmul.mubr.f32.gmra.mrb[0].mxu0 %v222
    %v311 = vpop.f32.mrb[0].mxu0
    %v312 = vadd.f32 0.0, %v311
    %v313 = vpop.f32.mrb[0].mxu0
    %314 = vmatprep.mubr.f32.mxu0 0.0
    %315 = vmatmul.mubr.f32.gmra.mrb[0].mxu0 %v225
    %v316 = vpop.f32.mrb[0].mxu0
    %v317 = vadd.f32 0.0, %v316
    %v318 = vpop.f32.mrb[0].mxu0
    %319 = vmatprep.mubr.f32.mxu0 0.0
    %320 = vmatmul.mubr.f32.gmra.mrb[0].mxu0 %v228
    %v321 = vpop.f32.mrb[0].mxu0
    %v322 = vadd.f32 0.0, %v321
    %v323 = vpop.f32.mrb[0].mxu0
    %324 = vdwg.mxu0
    %325 = vmatprep.subr.mxu0 0.0
    %326 = vmatpush1.msra.mxu0 %v203
    %327 = vmatprep.subr.mxu0 0.0
    %328 = vmatpush1.msra.mxu0 %v204
    %329 = vmatprep.subr.mxu0 0.0
    %330 = vmatpush1.msra.mxu0 0.0
    %331 = vmatprep.subr.mxu0 0.0
    %332 = vmatpush1.msra.mxu0 0.0
    %333 = vmatprep.subr.mxu0 0.0
    %334 = vmatpush1.msra.mxu0 0.0
    %335 = vmatprep.subr.mxu0 0.0
    %336 = vmatpush1.msra.mxu0 0.0
    %337 = vmatprep.subr.mxu0 0.0
    %338 = vmatpush1.msra.mxu0 0.0
    %339 = vmatprep.subr.mxu0 0.0
    %340 = vmatpush1.msra.mxu0 0.0
    %341 = vmatprep.subr.mxu0 0.0
    %342 = vmatpush1.msra.mxu0 0.0
    %343 = vmatprep.subr.mxu0 0.0
    %344 = vmatpush1.msra.mxu0 0.0
    %345 = vmatprep.subr.mxu0 0.0
    %346 = vmatpush1.msra.mxu0 0.0
    %347 = vmatprep.subr.mxu0 0.0
    %348 = vmatpush1.msra.mxu0 0.0
    %349 = vmatprep.subr.mxu0 0.0
    %350 = vmatpush1.msra.mxu0 0.0
    %351 = vmatprep.subr.mxu0 0.0
    %352 = vmatpush1.msra.mxu0 0.0
    %353 = vmatprep.subr.mxu0 0.0
    %354 = vmatpush1.msra.mxu0 0.0
    %355 = vmatprep.subr.mxu0 0.0
    %356 = vmatpush1.msra.mxu0 0.0
    %357 = vmatprep.subr.mxu0 0.0
    %358 = vmatpush1.msra.mxu0 0.0
    %359 = vmatprep.subr.mxu0 0.0
    %360 = vmatpush1.msra.mxu0 0.0
    %361 = vmatprep.subr.mxu0 0.0
    %362 = vmatpush1.msra.mxu0 0.0
    %363 = vmatprep.subr.mxu0 0.0
    %364 = vmatpush1.msra.mxu0 0.0
    %365 = vmatprep.subr.mxu0 0.0
    %366 = vmatpush1.msra.mxu0 0.0
    %367 = vmatprep.subr.mxu0 0.0
    %368 = vmatpush1.msra.mxu0 0.0
    %369 = vmatprep.subr.mxu0 0.0
    %370 = vmatpush1.msra.mxu0 0.0
    %371 = vmatprep.subr.mxu0 0.0
    %372 = vmatpush1.msra.mxu0 0.0
    %373 = vmatprep.subr.mxu0 0.0
    %374 = vmatpush1.msra.mxu0 0.0
    %375 = vmatprep.subr.mxu0 0.0
    %376 = vmatpush1.msra.mxu0 0.0
    %377 = vmatprep.subr.mxu0 0.0
    %378 = vmatpush1.msra.mxu0 0.0
    %379 = vmatprep.subr.mxu0 0.0
    %380 = vmatpush1.msra.mxu0 0.0
    %381 = vmatprep.subr.mxu0 0.0
    %382 = vmatpush1.msra.mxu0 0.0
    %383 = vmatprep.subr.mxu0 0.0
    %384 = vmatpush1.msra.mxu0 0.0
    %385 = vmatprep.subr.mxu0 0.0
    %386 = vmatpush1.msra.mxu0 0.0
    %387 = vmatprep.subr.mxu0 0.0
    %388 = vmatpush1.msra.mxu0 0.0
    %389 = vmatprep.mubr.f32.mxu0 0.0
    %390 = vmatmul.mubr.f32.gmra.mrb[0].mxu0 %v213
    %v391 = vpop.f32.mrb[0].mxu0
    %v392 = vadd.f32 0.0, %v391
    %v393 = vpop.f32.mrb[0].mxu0
    %394 = vmatprep.mubr.f32.mxu0 0.0
    %395 = vmatmul.mubr.f32.gmra.mrb[0].mxu0 %v216
    %v396 = vpop.f32.mrb[0].mxu0
    %v397 = vadd.f32 0.0, %v396
    %v398 = vpop.f32.mrb[0].mxu0
    %399 = vmatprep.mubr.f32.mxu0 0.0
    %400 = vmatmul.mubr.f32.gmra.mrb[0].mxu0 %v219
    %v401 = vpop.f32.mrb[0].mxu0
    %v402 = vadd.f32 0.0, %v401
    %v403 = vpop.f32.mrb[0].mxu0
    %404 = vmatprep.mubr.f32.mxu0 0.0
    %405 = vmatmul.mubr.f32.gmra.mrb[0].mxu0 %v222
    %v406 = vpop.f32.mrb[0].mxu0
    %v407 = vadd.f32 0.0, %v406
    %v408 = vpop.f32.mrb[0].mxu0
    %409 = vmatprep.mubr.f32.mxu0 0.0
    %410 = vmatmul.mubr.f32.gmra.mrb[0].mxu0 %v225
    %v411 = vpop.f32.mrb[0].mxu0
    %v412 = vadd.f32 0.0, %v411
    %v413 = vpop.f32.mrb[0].mxu0
    %414 = vmatprep.mubr.f32.mxu0 0.0
    %415 = vmatmul.mubr.f32.gmra.mrb[0].mxu0 %v228
    %v416 = vpop.f32.mrb[0].mxu0
    %v417 = vadd.f32 0.0, %v416
    %v418 = vpop.f32.mrb[0].mxu0
    %419 = vdwg.mxu0
    %v420 = vmul.f32 %v392, %v205
    %v421 = vmul.f32 %v397, %v206
    %v422 = vmul.f32 %v402, %v207
    %v423 = vmul.f32 %v407, %v208
    %v424 = vmul.f32 %v412, %v209
    %v425 = vmul.f32 %v417, %v210
    %v426 = vsel %vm211, %v420, 0.0
    %427 = vadd.xlane.f32.xlu0 %v426
    %v428 = vpop.xlane.xlu0 %427
    %v429 = vsel %vm211, %v421, 0.0
    %430 = vadd.xlane.f32.xlu0 %v429
    %v431 = vpop.xlane.xlu0 %430
    %v432 = vsel %vm211, %v422, 0.0
    %433 = vadd.xlane.f32.xlu0 %v432
    %v434 = vpop.xlane.xlu0 %433
    %v435 = vsel %vm211, %v423, 0.0
    %436 = vadd.xlane.f32.xlu0 %v435
    %v437 = vpop.xlane.xlu0 %436
    %v438 = vsel %vm211, %v424, 0.0
    %439 = vadd.xlane.f32.xlu0 %v438
    %v440 = vpop.xlane.xlu0 %439
    %v441 = vsel %vm211, %v425, 0.0
    %442 = vadd.xlane.f32.xlu0 %v441
    %v443 = vpop.xlane.xlu0 %442
    %v444 = vld [vmem:[%s2] sm:$0xff]
    %v445 = vld [vmem:[%s2 + $0x8] sm:$0xff]
    %v446 = vld [vmem:[%s2 + $0x10] sm:$0xff]
    %v447 = vld [vmem:[%s2 + $0x18] sm:$0xff]
    %v448 = vld [vmem:[%s2 + $0x20] sm:$0xff]
    %v449 = vld [vmem:[%s2 + $0x28] sm:$0xff]
    %v450 = vadd.f32 %v428, 1e-05
    %v451 = vadd.f32 %v431, 1e-05
    %v452 = vadd.f32 %v434, 1e-05
    %v453 = vadd.f32 %v437, 1e-05
    %v454 = vadd.f32 %v440, 1e-05
    %v455 = vadd.f32 %v443, 1e-05
    %v456 = vrsqrt.pop %v450
    %v457 = vrsqrt.pop %v451
    %v458 = vrsqrt.pop %v452
    %v459 = vrsqrt.pop %v453
    %v460 = vrsqrt.pop %v454
    %v461 = vrsqrt.pop %v455
    %v462 = vmul.f32 %v444, %v456
    %v463 = vmul.f32 %v445, %v457
    %v464 = vmul.f32 %v446, %v458
    %v465 = vmul.f32 %v447, %v459
    %v466 = vmul.f32 %v448, %v460
    %v467 = vmul.f32 %v449, %v461
    %469 = vset.pattern.permute.xlu0 0
    %470 = vperm.xlu0 %469, %v462
    %v471 = vpop.permute.xlu0 %470
    %474 = vset.pattern.permute.xlu0 0
    %475 = vperm.xlu0 %474, %v463
    %v476 = vpop.permute.xlu0 %475
    %479 = vset.pattern.permute.xlu0 0
    %480 = vperm.xlu0 %479, %v464
    %v481 = vpop.permute.xlu0 %480
    %484 = vset.pattern.permute.xlu0 0
    %485 = vperm.xlu0 %484, %v465
    %v486 = vpop.permute.xlu0 %485
    %489 = vset.pattern.permute.xlu0 0
    %490 = vperm.xlu0 %489, %v466
    %v491 = vpop.permute.xlu0 %490
    %494 = vset.pattern.permute.xlu0 0
    %495 = vperm.xlu0 %494, %v467
    %v496 = vpop.permute.xlu0 %495
    %v498 = vmul.f32 %v205, %v471
    %v499 = vmul.f32 %v206, %v476
    %v500 = vmul.f32 %v207, %v481
    %v501 = vmul.f32 %v208, %v486
    %v502 = vmul.f32 %v209, %v491
    %v503 = vmul.f32 %v210, %v496
    %v504 = vld [vmem:[%s3] sm:$0xff]
    %v505 = vld [vmem:[%s3 + $0x8] sm:$0xff]
    %v506 = vld [vmem:[%s3 + $0x10] sm:$0xff]
    %v507 = vld [vmem:[%s3 + $0x18] sm:$0xff]
    %v508 = vld [vmem:[%s3 + $0x20] sm:$0xff]
    %v509 = vld [vmem:[%s3 + $0x28] sm:$0xff]
    %v510 = vmul.f32 %v297, %v462
    %v511 = vmul.f32 %v302, %v463
    %v512 = vmul.f32 %v307, %v464
    %v513 = vmul.f32 %v312, %v465
    %v514 = vmul.f32 %v317, %v466
    %v515 = vmul.f32 %v322, %v467
    %v516 = vsub.f32 %v504, %v510
    %v517 = vsub.f32 %v505, %v511
    %v518 = vsub.f32 %v506, %v512
    %v519 = vsub.f32 %v507, %v513
    %v520 = vsub.f32 %v508, %v514
    %v521 = vsub.f32 %v509, %v515
    %523 = vset.pattern.permute.xlu0 0
    %524 = vperm.xlu0 %523, %v516
    %v525 = vpop.permute.xlu0 %524
    %528 = vset.pattern.permute.xlu0 0
    %529 = vperm.xlu0 %528, %v517
    %v530 = vpop.permute.xlu0 %529
    %533 = vset.pattern.permute.xlu0 0
    %534 = vperm.xlu0 %533, %v518
    %v535 = vpop.permute.xlu0 %534
    %538 = vset.pattern.permute.xlu0 0
    %539 = vperm.xlu0 %538, %v519
    %v540 = vpop.permute.xlu0 %539
    %543 = vset.pattern.permute.xlu0 0
    %544 = vperm.xlu0 %543, %v520
    %v545 = vpop.permute.xlu0 %544
    %548 = vset.pattern.permute.xlu0 0
    %549 = vperm.xlu0 %548, %v521
    %v550 = vpop.permute.xlu0 %549
    %v553 = vsel %vm211, %v498, 0
    %v556 = vsel %vm211, %v499, 0
    %v559 = vsel %vm211, %v500, 0
    %v562 = vsel %vm211, %v501, 0
    %v565 = vsel %vm211, %v502, 0
    %v568 = vsel %vm211, %v503, 0
    %570 = vmatprep.subr.mxu0 %v19
    %571 = vmatpush1.msra.mxu0 %v18
    %572 = vmatprep.subr.mxu0 %v21
    %573 = vmatpush1.msra.mxu0 %v20
    %574 = vmatprep.subr.mxu0 0.0
    %575 = vmatpush1.msra.mxu0 0.0
    %576 = vmatprep.subr.mxu0 0.0
    %577 = vmatpush1.msra.mxu0 0.0
    %578 = vmatprep.subr.mxu0 0.0
    %579 = vmatpush1.msra.mxu0 0.0
    %580 = vmatprep.subr.mxu0 0.0
    %581 = vmatpush1.msra.mxu0 0.0
    %582 = vmatprep.subr.mxu0 0.0
    %583 = vmatpush1.msra.mxu0 0.0
    %584 = vmatprep.subr.mxu0 0.0
    %585 = vmatpush1.msra.mxu0 0.0
    %586 = vmatprep.subr.mxu0 0.0
    %587 = vmatpush1.msra.mxu0 0.0
    %588 = vmatprep.subr.mxu0 0.0
    %589 = vmatpush1.msra.mxu0 0.0
    %590 = vmatprep.subr.mxu0 0.0
    %591 = vmatpush1.msra.mxu0 0.0
    %592 = vmatprep.subr.mxu0 0.0
    %593 = vmatpush1.msra.mxu0 0.0
    %594 = vmatprep.subr.mxu0 0.0
    %595 = vmatpush1.msra.mxu0 0.0
    %596 = vmatprep.subr.mxu0 0.0
    %597 = vmatpush1.msra.mxu0 0.0
    %598 = vmatprep.subr.mxu0 0.0
    %599 = vmatpush1.msra.mxu0 0.0
    %600 = vmatprep.subr.mxu0 0.0
    %601 = vmatpush1.msra.mxu0 0.0
    %602 = vmatprep.subr.mxu0 0.0
    %603 = vmatpush1.msra.mxu0 0.0
    %604 = vmatprep.subr.mxu0 0.0
    %605 = vmatpush1.msra.mxu0 0.0
    %606 = vmatprep.subr.mxu0 0.0
    %607 = vmatpush1.msra.mxu0 0.0
    %608 = vmatprep.subr.mxu0 0.0
    %609 = vmatpush1.msra.mxu0 0.0
    %610 = vmatprep.subr.mxu0 0.0
    %611 = vmatpush1.msra.mxu0 0.0
    %612 = vmatprep.subr.mxu0 0.0
    %613 = vmatpush1.msra.mxu0 0.0
    %614 = vmatprep.subr.mxu0 0.0
    %615 = vmatpush1.msra.mxu0 0.0
    %616 = vmatprep.subr.mxu0 0.0
    %617 = vmatpush1.msra.mxu0 0.0
    %618 = vmatprep.subr.mxu0 0.0
    %619 = vmatpush1.msra.mxu0 0.0
    %620 = vmatprep.subr.mxu0 0.0
    %621 = vmatpush1.msra.mxu0 0.0
    %622 = vmatprep.subr.mxu0 0.0
    %623 = vmatpush1.msra.mxu0 0.0
    %624 = vmatprep.subr.mxu0 0.0
    %625 = vmatpush1.msra.mxu0 0.0
    %626 = vmatprep.subr.mxu0 0.0
    %627 = vmatpush1.msra.mxu0 0.0
    %628 = vmatprep.subr.mxu0 0.0
    %629 = vmatpush1.msra.mxu0 0.0
    %630 = vmatprep.subr.mxu0 0.0
    %631 = vmatpush1.msra.mxu0 0.0
    %632 = vmatprep.subr.mxu0 0.0
    %633 = vmatpush1.msra.mxu0 0.0
    %634 = vmatprep.mubr.f32.mxu0 0.0
    %635 = vmatmul.mubr.f32.gmra.mrb[0].mxu0 %v553
    %v636 = vpop.f32.mrb[0].mxu0
    %v637 = vadd.f32 %v525, %v636
    %v638 = vpop.f32.mrb[0].mxu0
    %v639 = vadd.f32 %v525, %v638
    %640 = vmatprep.mubr.f32.mxu0 0.0
    %641 = vmatmul.mubr.f32.gmra.mrb[0].mxu0 %v556
    %v642 = vpop.f32.mrb[0].mxu0
    %v643 = vadd.f32 %v530, %v642
    %v644 = vpop.f32.mrb[0].mxu0
    %v645 = vadd.f32 %v530, %v644
    %646 = vmatprep.mubr.f32.mxu0 0.0
    %647 = vmatmul.mubr.f32.gmra.mrb[0].mxu0 %v559
    %v648 = vpop.f32.mrb[0].mxu0
    %v649 = vadd.f32 %v535, %v648
    %v650 = vpop.f32.mrb[0].mxu0
    %v651 = vadd.f32 %v535, %v650
    %652 = vmatprep.mubr.f32.mxu0 0.0
    %653 = vmatmul.mubr.f32.gmra.mrb[0].mxu0 %v562
    %v654 = vpop.f32.mrb[0].mxu0
    %v655 = vadd.f32 %v540, %v654
    %v656 = vpop.f32.mrb[0].mxu0
    %v657 = vadd.f32 %v540, %v656
    %658 = vmatprep.mubr.f32.mxu0 0.0
    %659 = vmatmul.mubr.f32.gmra.mrb[0].mxu0 %v565
    %v660 = vpop.f32.mrb[0].mxu0
    %v661 = vadd.f32 %v545, %v660
    %v662 = vpop.f32.mrb[0].mxu0
    %v663 = vadd.f32 %v545, %v662
    %664 = vmatprep.mubr.f32.mxu0 0.0
    %665 = vmatmul.mubr.f32.gmra.mrb[0].mxu0 %v568
    %v666 = vpop.f32.mrb[0].mxu0
    %v667 = vadd.f32 %v550, %v666
    %v668 = vpop.f32.mrb[0].mxu0
    %v669 = vadd.f32 %v550, %v668
    %670 = vdwg.mxu0
    %v671 = vmax.f32 %v637, 0.0
    %v672 = vmax.f32 %v639, 0.0
    %v673 = vmax.f32 %v643, 0.0
    %v674 = vmax.f32 %v645, 0.0
    %v675 = vmax.f32 %v649, 0.0
    %v676 = vmax.f32 %v651, 0.0
    %v677 = vmax.f32 %v655, 0.0
    %v678 = vmax.f32 %v657, 0.0
    %v679 = vmax.f32 %v661, 0.0
    %v680 = vmax.f32 %v663, 0.0
    %v681 = vmax.f32 %v667, 0.0
    %v682 = vmax.f32 %v669, 0.0
    %683 = vst [vmem:[#allocation2] sm:$0xff] %v671
    %684 = vst [vmem:[#allocation2 + $0x8] sm:$0xff] %v672
    %685 = vst [vmem:[#allocation2 + $0x10] sm:$0xff] %v673
    %686 = vst [vmem:[#allocation2 + $0x18] sm:$0xff] %v674
    %687 = vst [vmem:[#allocation2 + $0x20] sm:$0xff] %v675
    %688 = vst [vmem:[#allocation2 + $0x28] sm:$0xff] %v676
    %689 = vst [vmem:[#allocation2 + $0x30] sm:$0xff] %v677
    %690 = vst [vmem:[#allocation2 + $0x38] sm:$0xff] %v678
    %691 = vst [vmem:[#allocation2 + $0x40] sm:$0xff] %v679
    %692 = vst [vmem:[#allocation2 + $0x48] sm:$0xff] %v680
    %693 = vst [vmem:[#allocation2 + $0x50] sm:$0xff] %v681
    %694 = vst [vmem:[#allocation2 + $0x58] sm:$0xff] %v682
    %v695 = vld [vmem:[%s30] sm:$0xff]
    %v696 = vld [vmem:[%s30 + $0x8] sm:$0xff]
    %v697 = vld [vmem:[%s30 + $0x10] sm:$0xff]
    %v698 = vld [vmem:[%s30 + $0x18] sm:$0xff]
    %699 = vmatprep.subr.mxu0 %v696
    %700 = vmatpush1.msra.mxu0 %v695
    %701 = vmatprep.subr.mxu0 %v698
    %702 = vmatpush1.msra.mxu0 %v697
    %703 = vmatprep.subr.mxu0 0.0
    %704 = vmatpush1.msra.mxu0 0.0
    %705 = vmatprep.subr.mxu0 0.0
    %706 = vmatpush1.msra.mxu0 0.0
    %707 = vmatprep.subr.mxu0 0.0
    %708 = vmatpush1.msra.mxu0 0.0
    %709 = vmatprep.subr.mxu0 0.0
    %710 = vmatpush1.msra.mxu0 0.0
    %711 = vmatprep.subr.mxu0 0.0
    %712 = vmatpush1.msra.mxu0 0.0
    %713 = vmatprep.subr.mxu0 0.0
    %714 = vmatpush1.msra.mxu0 0.0
    %715 = vmatprep.subr.mxu0 0.0
    %716 = vmatpush1.msra.mxu0 0.0
    %717 = vmatprep.subr.mxu0 0.0
    %718 = vmatpush1.msra.mxu0 0.0
    %719 = vmatprep.subr.mxu0 0.0
    %720 = vmatpush1.msra.mxu0 0.0
    %721 = vmatprep.subr.mxu0 0.0
    %722 = vmatpush1.msra.mxu0 0.0
    %723 = vmatprep.subr.mxu0 0.0
    %724 = vmatpush1.msra.mxu0 0.0
    %725 = vmatprep.subr.mxu0 0.0
    %726 = vmatpush1.msra.mxu0 0.0
    %727 = vmatprep.subr.mxu0 0.0
    %728 = vmatpush1.msra.mxu0 0.0
    %729 = vmatprep.subr.mxu0 0.0
    %730 = vmatpush1.msra.mxu0 0.0
    %731 = vmatprep.subr.mxu0 0.0
    %732 = vmatpush1.msra.mxu0 0.0
    %733 = vmatprep.subr.mxu0 0.0
    %734 = vmatpush1.msra.mxu0 0.0
    %735 = vmatprep.subr.mxu0 0.0
    %736 = vmatpush1.msra.mxu0 0.0
    %737 = vmatprep.subr.mxu0 0.0
    %738 = vmatpush1.msra.mxu0 0.0
    %739 = vmatprep.subr.mxu0 0.0
    %740 = vmatpush1.msra.mxu0 0.0
    %741 = vmatprep.subr.mxu0 0.0
    %742 = vmatpush1.msra.mxu0 0.0
    %743 = vmatprep.subr.mxu0 0.0
    %744 = vmatpush1.msra.mxu0 0.0
    %745 = vmatprep.subr.mxu0 0.0
    %746 = vmatpush1.msra.mxu0 0.0
    %747 = vmatprep.subr.mxu0 0.0
    %748 = vmatpush1.msra.mxu0 0.0
    %749 = vmatprep.subr.mxu0 0.0
    %750 = vmatpush1.msra.mxu0 0.0
    %751 = vmatprep.subr.mxu0 0.0
    %752 = vmatpush1.msra.mxu0 0.0
    %753 = vmatprep.subr.mxu0 0.0
    %754 = vmatpush1.msra.mxu0 0.0
    %755 = vmatprep.subr.mxu0 0.0
    %756 = vmatpush1.msra.mxu0 0.0
    %757 = vmatprep.subr.mxu0 0.0
    %758 = vmatpush1.msra.mxu0 0.0
    %759 = vmatprep.subr.mxu0 0.0
    %760 = vmatpush1.msra.mxu0 0.0
    %761 = vmatprep.subr.mxu0 0.0
    %762 = vmatpush1.msra.mxu0 0.0
    %763 = vmatprep.mubr.f32.mxu0 0.0
    %764 = vmatmul.mubr.f32.gmra.mrb[0].mxu0 %v553
    %v765 = vpop.f32.mrb[0].mxu0
    %v766 = vadd.f32 %v525, %v765
    %v767 = vpop.f32.mrb[0].mxu0
    %v768 = vadd.f32 %v525, %v767
    %769 = vmatprep.mubr.f32.mxu0 0.0
    %770 = vmatmul.mubr.f32.gmra.mrb[0].mxu0 %v556
    %v771 = vpop.f32.mrb[0].mxu0
    %v772 = vadd.f32 %v530, %v771
    %v773 = vpop.f32.mrb[0].mxu0
    %v774 = vadd.f32 %v530, %v773
    %775 = vmatprep.mubr.f32.mxu0 0.0
    %776 = vmatmul.mubr.f32.gmra.mrb[0].mxu0 %v559
    %v777 = vpop.f32.mrb[0].mxu0
    %v778 = vadd.f32 %v535, %v777
    %v779 = vpop.f32.mrb[0].mxu0
    %v780 = vadd.f32 %v535, %v779
    %781 = vmatprep.mubr.f32.mxu0 0.0
    %782 = vmatmul.mubr.f32.gmra.mrb[0].mxu0 %v562
    %v783 = vpop.f32.mrb[0].mxu0
    %v784 = vadd.f32 %v540, %v783
    %v785 = vpop.f32.mrb[0].mxu0
    %v786 = vadd.f32 %v540, %v785
    %787 = vmatprep.mubr.f32.mxu0 0.0
    %788 = vmatmul.mubr.f32.gmra.mrb[0].mxu0 %v565
    %v789 = vpop.f32.mrb[0].mxu0
    %v790 = vadd.f32 %v545, %v789
    %v791 = vpop.f32.mrb[0].mxu0
    %v792 = vadd.f32 %v545, %v791
    %793 = vmatprep.mubr.f32.mxu0 0.0
    %794 = vmatmul.mubr.f32.gmra.mrb[0].mxu0 %v568
    %v795 = vpop.f32.mrb[0].mxu0
    %v796 = vadd.f32 %v550, %v795
    %v797 = vpop.f32.mrb[0].mxu0
    %v798 = vadd.f32 %v550, %v797
    %799 = vdwg.mxu0
    %v800 = vmax.f32 %v766, 0.0
    %v801 = vmax.f32 %v768, 0.0
    %v802 = vmax.f32 %v772, 0.0
    %v803 = vmax.f32 %v774, 0.0
    %v804 = vmax.f32 %v778, 0.0
    %v805 = vmax.f32 %v780, 0.0
    %v806 = vmax.f32 %v784, 0.0
    %v807 = vmax.f32 %v786, 0.0
    %v808 = vmax.f32 %v790, 0.0
    %v809 = vmax.f32 %v792, 0.0
    %v810 = vmax.f32 %v796, 0.0
    %v811 = vmax.f32 %v798, 0.0
    %s812 = scalar_lea.vmem [#allocation2], 96
    %813 = vst [vmem:[%s812] sm:$0xff] %v800
    %814 = vst [vmem:[%s812 + $0x8] sm:$0xff] %v801
    %815 = vst [vmem:[%s812 + $0x10] sm:$0xff] %v802
    %816 = vst [vmem:[%s812 + $0x18] sm:$0xff] %v803
    %817 = vst [vmem:[%s812 + $0x20] sm:$0xff] %v804
    %818 = vst [vmem:[%s812 + $0x28] sm:$0xff] %v805
    %819 = vst [vmem:[%s812 + $0x30] sm:$0xff] %v806
    %820 = vst [vmem:[%s812 + $0x38] sm:$0xff] %v807
    %821 = vst [vmem:[%s812 + $0x40] sm:$0xff] %v808
    %822 = vst [vmem:[%s812 + $0x48] sm:$0xff] %v809
    %823 = vst [vmem:[%s812 + $0x50] sm:$0xff] %v810
    %824 = vst [vmem:[%s812 + $0x58] sm:$0xff] %v811
    // Predicated region
    $region18: #{tpu_custom_call.1} parent=1 // pred_check
      _
    $region19: #{tpu_custom_call.1} parent=1 // pred_check_branch
      %826 = sbr.rel (0) target = $region21
    $region20: #{tpu_custom_call.1} parent=1 // pred_region
      %s828 = ssub.s32 3072, 3072
      %829 = vsyncadd [#allocation3], %s828
      %s830 = sshll.u32 [#allocation2], 4
      %s831 = int_to_ptr.vmem [resolvable:$true] %s830
      %836 = dma.vmem_to_hbm [thread:$0]  %s831, 3072, %s4, [#allocation3], 256, 256, 16
    $region21: #{tpu_custom_call.1} parent=1 // pred_fallthru
      _
    // Predicated region
    $region22: #{tpu_custom_call.1} parent=1 // pred_check
      _
    $region23: #{tpu_custom_call.1} parent=1 // pred_check_branch
      %838 = sbr.rel (0) target = $region25
    $region24: #{tpu_custom_call.1} parent=1 // pred_region
      %839 = dma.done [#allocation3], 3072
    $region25: #{tpu_custom_call.1} parent=1 // pred_fallthru
      _
    %840 = vsyncpa [#allocation3], 1

</llo_original>
